<compile_context>
chip_gen: v5e
topology: v5e:2x2
jax: 0.10.0
libtpu: 0.0.40
codegen_flags: <defaults>
</compile_context>

<pallas_src>
import functools

import jax
import jax.numpy as jnp
from jax.experimental import pallas as pl
from jax.experimental.pallas import tpu as pltpu

_LN_EPS = 1e-5          # torch.nn.LayerNorm default
_MIB = 1024 * 1024


def _round_up(x, m):
    return ((x + m - 1) // m) * m


# ---------------------------------------------------------------------------
# Kernel. grid = (row_tiles, ff_tiles); rows are "parallel", d_ff is reduction.
# ---------------------------------------------------------------------------
def ffn_kernel(x_ref, w1_ref, b1_ref, w2_ref, b2_ref, g_ref, beta_ref,
               o_ref, acc_ref):
    k = pl.program_id(1)
    nk = pl.num_programs(1)

    @pl.when(k == 0)
    def _():
        acc_ref[...] = jnp.zeros_like(acc_ref)

    # x block stays resident across the whole k axis (index_map constant in k).
    x = x_ref[...]                                               # [tm, d_model]

    # layer-1 slice: MXU in input dtype with f32 accumulation, then one fused
    # bias + ReLU + cast pass back to the MXU operand dtype.
    h = jnp.dot(x, w1_ref[...], preferred_element_type=jnp.float32)
    h = jnp.maximum(h + b1_ref[...].astype(jnp.float32),
                    0.0).astype(w2_ref.dtype)                    # [tm, tk]

    # layer-2 slice, accumulated into the f32 VMEM scratch.
    acc_ref[...] += jnp.dot(h, w2_ref[...],
                            preferred_element_type=jnp.float32)  # [tm, d_model]

    @pl.when(k == nk - 1)
    def _():
        # residual + LayerNorm epilogue (f32), single-pass mean / variance.
        y = acc_ref[...] + b2_ref[...].astype(jnp.float32) + x.astype(jnp.float32)
        inv_n = 1.0 / y.shape[-1]
        mean = jnp.sum(y, axis=-1, keepdims=True) * inv_n
        var = jnp.maximum(
            jnp.sum(y * y, axis=-1, keepdims=True) * inv_n - mean * mean, 0.0)
        inv = jax.lax.rsqrt(var + _LN_EPS)                       # EUP, ~free
        g = g_ref[...].astype(jnp.float32)
        b = beta_ref[...].astype(jnp.float32)
        o_ref[...] = ((y - mean) * (inv * g) + b).astype(o_ref.dtype)


# ---------------------------------------------------------------------------
# Generation-aware hardware targets (VMEM budget, MXU M-dim, row-tile target).
# ---------------------------------------------------------------------------
def _hw_info():
    kind = ""
    try:
        kind = jax.devices()[0].device_kind.lower()
    except Exception:
        pass
    cap = None
    try:
        cap = int(pltpu.get_tpu_info().vmem_capacity_bytes)
    except Exception:
        cap = None

    if "v7" in kind or "7x" in kind:
        cap = cap or 64 * _MIB
        # Never request the entire 64 MiB: leave compiler/internal headroom.
        return dict(vmem_budget=min(52 * _MIB, int(cap * 0.82)),
                    mxu_m=256, target_tm=1024, min_row_tiles=2)
    if "v6" in kind:
        cap = cap or 128 * _MIB
        return dict(vmem_budget=min(100 * _MIB, int(cap * 0.80)),
                    mxu_m=256, target_tm=1024, min_row_tiles=1)
    if "v5 lite" in kind or "v5e" in kind or "v5lite" in kind:
        cap = cap or 128 * _MIB
        return dict(vmem_budget=min(96 * _MIB, int(cap * 0.75)),
                    mxu_m=128, target_tm=512, min_row_tiles=1)
    if "v5" in kind or "v4" in kind:      # v5p / v4: 128 MiB VMEM, megacore
        cap = cap or 128 * _MIB
        return dict(vmem_budget=min(96 * _MIB, int(cap * 0.75)),
                    mxu_m=128, target_tm=512, min_row_tiles=2)
    # Unknown / older parts: conservative defaults.
    cap = cap or 64 * _MIB
    return dict(vmem_budget=min(48 * _MIB, int(cap * 0.75)),
                mxu_m=128, target_tm=512, min_row_tiles=1)


def _vmem_usage(tm, tk, d_model, x_itemsize, w_itemsize):
    x_buf = 2 * tm * d_model * x_itemsize         # double-buffered input rows
    o_buf = 2 * tm * d_model * x_itemsize         # double-buffered output rows
    acc = tm * d_model * 4                        # f32 accumulator scratch
    w_buf = 2 * 2 * d_model * tk * w_itemsize     # W1 + W2 slabs, double-buffered
    vec = 2 * (tk + 3 * d_model) * w_itemsize     # b1 slice, b2, gamma, beta
    return x_buf + o_buf + acc + w_buf + vec


def _tk_candidates(d_ff, block_ff):
    if block_ff is not None and d_ff % block_ff == 0:
        return [block_ff]
    cands = [d_ff]
    for c in (2048, 1024, 512, 384, 256, 128):
        if c < d_ff and d_ff % c == 0:
            cands.append(c)
    return cands                                   # descending: prefer few k steps


def _choose_tiles(rows, d_model, d_ff, x_itemsize, w_itemsize, hw,
                  block_rows=None, block_ff=None):
    sub = 16 if x_itemsize <= 2 else 8             # bf16 wants 16-row sublane tiles
    fit = int(hw["vmem_budget"] * 0.9)
    tks = _tk_candidates(d_ff, block_ff)

    def best_tk(tm):
        for tk in tks:
            if _vmem_usage(tm, tk, d_model, x_itemsize, w_itemsize) <= fit:
                return tk
        return None

    rows_a = _round_up(rows, sub)

    if block_rows is not None:                     # explicit override
        tm = min(_round_up(block_rows, sub), rows_a)
        return tm, (best_tk(tm) or tks[-1])

    # Candidate row tiles: MXU-aligned multiples up to the generation target,
    # plus low-padding splits of the actual row count.
    cands = set()
    c = hw["target_tm"]
    while c >= hw["mxu_m"]:
        if c <= rows_a:
            cands.add(c)
        c -= hw["mxu_m"]
    cands.add(min(rows_a, hw["target_tm"]))
    for n in range(2, 9):
        t = _round_up(-(-rows // n), sub)
        if sub <= t <= hw["target_tm"]:
            cands.add(t)
    cands.add(sub)

    scored = []
    for tm in sorted(cands, reverse=True):
        tk = best_tk(tm)
        if tk is None:
            continue
        rows_p = _round_up(rows, tm)
        scored.append((tm, tk, rows_p // tm, (rows_p - rows) / rows))
    if not scored:
        return sub, tks[-1]

    can_split = rows_a >= hw["min_row_tiles"] * sub
    ok_waste = lambda s: s[3] <= 0.125
    ok_cores = lambda s: (s[2] >= hw["min_row_tiles"]) or not can_split
    for filt in ((lambda s: ok_waste(s) and ok_cores(s)), ok_waste,
                 (lambda s: True)):
        sel = [s for s in scored if filt(s)]
        if sel:
            sel.sort(key=lambda s: (s[0], s[1]), reverse=True)
            return sel[0][0], sel[0][1]


# ---------------------------------------------------------------------------
# Wrapper
# ---------------------------------------------------------------------------
@functools.partial(jax.jit, static_argnames=("block_rows", "block_ff"))
def feed_forward_network(x, w1, b1, w2, b2, gamma, beta, *,
                         block_rows=None, block_ff=None):
    """x: [batch, seq, d_model]; w1: [d_model, d_ff]; w2: [d_ff, d_model].

    d_model should ideally be a multiple of 128 (lane-dense output stores);
    other values are correct but lower to masked stores.
    """
    batch, seq, d_model = x.shape
    d_ff = w1.shape[1]
    rows = batch * seq

    x_itemsize = jnp.dtype(x.dtype).itemsize
    w_itemsize = jnp.dtype(w1.dtype).itemsize
    hw = _hw_info()
    tm, tk = _choose_tiles(rows, d_model, d_ff, x_itemsize, w_itemsize, hw,
                           block_rows=block_rows, block_ff=block_ff)

    rows_p = _round_up(rows, tm)
    x2d = x.reshape(rows, d_model)
    if rows_p != rows:
        # Padded rows produce well-defined (finite) values that are sliced off.
        x2d = jnp.pad(x2d, ((0, rows_p - rows), (0, 0)))

    n_row_tiles = rows_p // tm
    grid = (n_row_tiles, d_ff // tk)

    cost = pl.CostEstimate(
        flops=4 * rows_p * d_model * d_ff,
        transcendentals=rows_p,
        bytes_accessed=(2 * rows_p * d_model * x_itemsize
                        # weights are re-streamed once per row tile:
                        + n_row_tiles * (w1.size + w2.size) * w_itemsize
                        + (b1.size + b2.size + gamma.size + beta.size)
                        * w_itemsize),
    )

    out2d = pl.pallas_call(
        ffn_kernel,
        out_shape=jax.ShapeDtypeStruct((rows_p, d_model), x.dtype),
        grid_spec=pltpu.PrefetchScalarGridSpec(
            num_scalar_prefetch=0,
            grid=grid,
            in_specs=[
                pl.BlockSpec((tm, d_model), lambda i, k: (i, 0)),   # x rows
                pl.BlockSpec((d_model, tk), lambda i, k: (0, k)),   # W1 slice
                pl.BlockSpec((1, tk),       lambda i, k: (0, k)),   # b1 slice
                pl.BlockSpec((tk, d_model), lambda i, k: (k, 0)),   # W2 slice
                pl.BlockSpec((1, d_model),  lambda i, k: (0, 0)),   # b2
                pl.BlockSpec((1, d_model),  lambda i, k: (0, 0)),   # ln gamma
                pl.BlockSpec((1, d_model),  lambda i, k: (0, 0)),   # ln beta
            ],
            out_specs=pl.BlockSpec((tm, d_model), lambda i, k: (i, 0)),
            scratch_shapes=[pltpu.VMEM((tm, d_model), jnp.float32)],
        ),
        compiler_params=pltpu.CompilerParams(
            dimension_semantics=("parallel", "arbitrary"),
            vmem_limit_bytes=hw["vmem_budget"],
        ),
        cost_estimate=cost,
    )(x2d, w1, b1, w2, b2, gamma, beta)

    return out2d[:rows].reshape(batch, seq, d_model)


# ---------------------------------------------------------------------------
# Params / reference / demo
# ---------------------------------------------------------------------------
def init_params(key, d_model, d_ff, dtype=jnp.float32):
    """Xavier-normal weights (matching nn.init.xavier_normal_), zero biases
    (deterministic choice for this synthetic test), LN gamma=1, beta=0."""
    k1, k2 = jax.random.split(key)
    std1 = (2.0 / (d_model + d_ff)) ** 0.5
    std2 = (2.0 / (d_ff + d_model)) ** 0.5
    # torch Linear weight is (out, in); we store transposed (in, out) for x @ W.
    w1 = (jax.random.normal(k1, (d_ff, d_model), jnp.float32) * std1).T
    w2 = (jax.random.normal(k2, (d_model, d_ff), jnp.float32) * std2).T
    b1 = jnp.zeros((1, d_ff), jnp.float32)
    b2 = jnp.zeros((1, d_model), jnp.float32)
    gamma = jnp.ones((1, d_model), jnp.float32)
    beta = jnp.zeros((1, d_model), jnp.float32)
    return tuple(p.astype(dtype) for p in (w1, b1, w2, b2, gamma, beta))


def reference(x, w1, b1, w2, b2, gamma, beta):
    """Pure-JAX reference mirroring the kernel's dtype handling."""
    xf = x.astype(jnp.float32)
    h = jnp.dot(x, w1, preferred_element_type=jnp.float32) + b1[0].astype(jnp.float32)
    h = jnp.maximum(h, 0.0)
    y = jnp.dot(h.astype(w2.dtype), w2, preferred_element_type=jnp.float32)
    y = y + b2[0].astype(jnp.float32) + xf
    mean = jnp.mean(y, axis=-1, keepdims=True)
    var = jnp.mean((y - mean) ** 2, axis=-1, keepdims=True)
    out = ((y - mean) * jax.lax.rsqrt(var + _LN_EPS)
           * gamma[0].astype(jnp.float32) + beta[0].astype(jnp.float32))
    return out.astype(x.dtype)


if __name__ == "__main__":
    batch, seq, d_model, d_ff = 2, 8, 128, 256
    key = jax.random.PRNGKey(0)
    kx, kp = jax.random.split(key)

    # --- f32 path, auto tile selection ---
    x = jax.random.normal(kx, (batch, seq, d_model), jnp.float32)
    params = init_params(kp, d_model, d_ff, jnp.float32)
    out = feed_forward_network(x, *params)
    jax.block_until_ready(out)
    ref = reference(x, *params)
    assert out.shape == x.shape
    assert jnp.allclose(out, ref, atol=5e-3, rtol=5e-3)

    # --- bf16 path (MXU-friendly: bf16 operands, f32 accumulation) ---
    xb = x.astype(jnp.bfloat16)
    pb = tuple(p.astype(jnp.bfloat16) for p in params)
    outb = feed_forward_network(xb, *pb)
    jax.block_until_ready(outb)
    refb = reference(xb, *pb)
    assert outb.shape == x.shape
    assert jnp.allclose(outb.astype(jnp.float32), refb.astype(jnp.float32),
                        atol=3e-2, rtol=3e-2)

    # --- explicit multi-tile grid (2 row tiles x 2 ff tiles) to exercise
    #     the accumulator init / finalize path across both grid axes ---
    out_t = feed_forward_network(x, *params, block_rows=8, block_ff=128)
    jax.block_until_ready(out_t)
    assert jnp.allclose(out_t, ref, atol=5e-3, rtol=5e-3)

    print("KERNEL_OK")
</pallas_src>

<mosaic_0001>
module attributes {stable_mosaic.version = 11 : i64} {
  func.func @ffn_kernel(%arg0: i32, %arg1: i32, %arg2: memref<16x128xf32, #tpu.memory_space<vmem>>, %arg3: memref<128x256xf32, #tpu.memory_space<vmem>>, %arg4: memref<1x256xf32, #tpu.memory_space<vmem>>, %arg5: memref<256x128xf32, #tpu.memory_space<vmem>>, %arg6: memref<1x128xf32, #tpu.memory_space<vmem>>, %arg7: memref<1x128xf32, #tpu.memory_space<vmem>>, %arg8: memref<1x128xf32, #tpu.memory_space<vmem>>, %arg9: memref<16x128xf32, #tpu.memory_space<vmem>>, %arg10: memref<16x128xf32, #tpu.memory_space<vmem>>) attributes {dimension_semantics = [#tpu.dimension_semantics<parallel>, #tpu.dimension_semantics<arbitrary>], iteration_bounds = array<i64: 1, 1>, scalar_prefetch = 0 : i64, scratch_operands = 1 : i64, tpu.core_type = #tpu.core_type<tc>, window_params = [{transform_indices = @transform_0, window_bounds = array<i64: 16, 128>}, {transform_indices = @transform_1, window_bounds = array<i64: 128, 256>}, {transform_indices = @transform_2, window_bounds = array<i64: 1, 256>}, {transform_indices = @transform_3, window_bounds = array<i64: 256, 128>}, {pipeline_mode = #tpu.pipeline_mode<synchronous>, transform_indices = @transform_4, window_bounds = array<i64: 1, 128>}, {pipeline_mode = #tpu.pipeline_mode<synchronous>, transform_indices = @transform_5, window_bounds = array<i64: 1, 128>}, {pipeline_mode = #tpu.pipeline_mode<synchronous>, transform_indices = @transform_6, window_bounds = array<i64: 1, 128>}, {transform_indices = @transform_7, window_bounds = array<i64: 16, 128>}]} {
    %c0_i32 = arith.constant 0 : i32
    %0 = arith.cmpi eq, %arg1, %c0_i32 : i32
    %1 = arith.extui %0 : i1 to i32
    %c0_i32_0 = arith.constant 0 : i32
    %2 = arith.cmpi ne, %1, %c0_i32_0 : i32
    scf.if %2 {
      %cst_16 = arith.constant 0.000000e+00 : f32
      %19 = vector.broadcast %cst_16 : f32 to vector<16x128xf32>
      %c0_17 = arith.constant 0 : index
      %c0_18 = arith.constant 0 : index
      %20 = vector.load %arg10[%c0_17, %c0_18] : memref<16x128xf32, #tpu.memory_space<vmem>>, vector<16x128xf32>
      tpu.vector_store %arg10[%c0_17, %c0_18], %19 {strides = array<i32>} : memref<16x128xf32, #tpu.memory_space<vmem>>, vector<16x128xf32>,
    } else {
    }
    %c0 = arith.constant 0 : index
    %c0_1 = arith.constant 0 : index
    %3 = vector.load %arg2[%c0, %c0_1] : memref<16x128xf32, #tpu.memory_space<vmem>>, vector<16x128xf32>
    %c0_2 = arith.constant 0 : index
    %c0_3 = arith.constant 0 : index
    %4 = vector.load %arg3[%c0_2, %c0_3] : memref<128x256xf32, #tpu.memory_space<vmem>>, vector<128x256xf32>
    %cst = arith.constant dense<0.000000e+00> : vector<16x256xf32>
    %5 = tpu.matmul %3, %4, %cst {dimension_numbers = #tpu.dot_dimension_numbers<[1], [0], [0], [1], [0, 0, 1, 1], [], []>} : vector<16x128xf32>, vector<128x256xf32>, vector<16x256xf32> -> vector<16x256xf32>
    %c0_4 = arith.constant 0 : index
    %c0_5 = arith.constant 0 : index
    %6 = vector.load %arg4[%c0_4, %c0_5] : memref<1x256xf32, #tpu.memory_space<vmem>>, vector<1x256xf32>
    %7 = vector.broadcast %6 : vector<1x256xf32> to vector<16x256xf32>
    %8 = arith.addf %5, %7 : vector<16x256xf32>
    %cst_6 = arith.constant 0.000000e+00 : f32
    %9 = vector.broadcast %cst_6 : f32 to vector<16x256xf32>
    %10 = arith.maximumf %8, %9 : vector<16x256xf32>
    %c0_7 = arith.constant 0 : index
    %c0_8 = arith.constant 0 : index
    %11 = vector.load %arg10[%c0_7, %c0_8] : memref<16x128xf32, #tpu.memory_space<vmem>>, vector<16x128xf32>
    %c0_9 = arith.constant 0 : index
    %c0_10 = arith.constant 0 : index
    %12 = vector.load %arg5[%c0_9, %c0_10] : memref<256x128xf32, #tpu.memory_space<vmem>>, vector<256x128xf32>
    %cst_11 = arith.constant dense<0.000000e+00> : vector<16x128xf32>
    %13 = tpu.matmul %10, %12, %cst_11 {dimension_numbers = #tpu.dot_dimension_numbers<[1], [0], [0], [1], [0, 0, 1, 1], [], []>} : vector<16x256xf32>, vector<256x128xf32>, vector<16x128xf32> -> vector<16x128xf32>
    %14 = arith.addf %11, %13 : vector<16x128xf32>
    %c0_12 = arith.constant 0 : index
    %c0_13 = arith.constant 0 : index
    %15 = vector.load %arg10[%c0_12, %c0_13] : memref<16x128xf32, #tpu.memory_space<vmem>>, vector<16x128xf32>
    tpu.vector_store %arg10[%c0_12, %c0_13], %14 {strides = array<i32>} : memref<16x128xf32, #tpu.memory_space<vmem>>, vector<16x128xf32>,
    %c0_i32_14 = arith.constant 0 : i32
    %16 = arith.cmpi eq, %arg1, %c0_i32_14 : i32
    %17 = arith.extui %16 : i1 to i32
    %c0_i32_15 = arith.constant 0 : i32
    %18 = arith.cmpi ne, %17, %c0_i32_15 : i32
    scf.if %18 {
      %c0_16 = arith.constant 0 : index
      %c0_17 = arith.constant 0 : index
      %19 = vector.load %arg10[%c0_16, %c0_17] : memref<16x128xf32, #tpu.memory_space<vmem>>, vector<16x128xf32>
      %c0_18 = arith.constant 0 : index
      %c0_19 = arith.constant 0 : index
      %20 = vector.load %arg6[%c0_18, %c0_19] : memref<1x128xf32, #tpu.memory_space<vmem>>, vector<1x128xf32>
      %21 = vector.broadcast %20 : vector<1x128xf32> to vector<16x128xf32>
      %22 = arith.addf %19, %21 : vector<16x128xf32>
      %23 = arith.addf %22, %3 : vector<16x128xf32>
      %cst_20 = arith.constant dense<0.000000e+00> : vector<16xf32>
      %24 = vector.multi_reduction <add>, %23, %cst_20 [1] : vector<16x128xf32> to vector<16xf32>
      %25 = vector.shape_cast %24 : vector<16xf32> to vector<16x1xf32>
      %cst_21 = arith.constant 7.812500e-03 : f32
      %26 = vector.broadcast %cst_21 : f32 to vector<16x1xf32>
      %27 = arith.mulf %25, %26 : vector<16x1xf32>
      %28 = arith.mulf %23, %23 : vector<16x128xf32>
      %cst_22 = arith.constant dense<0.000000e+00> : vector<16xf32>
      %29 = vector.multi_reduction <add>, %28, %cst_22 [1] : vector<16x128xf32> to vector<16xf32>
      %30 = vector.shape_cast %29 : vector<16xf32> to vector<16x1xf32>
      %cst_23 = arith.constant 7.812500e-03 : f32
      %31 = vector.broadcast %cst_23 : f32 to vector<16x1xf32>
      %32 = arith.mulf %30, %31 : vector<16x1xf32>
      %33 = arith.mulf %27, %27 : vector<16x1xf32>
      %34 = arith.subf %32, %33 : vector<16x1xf32>
      %cst_24 = arith.constant 0.000000e+00 : f32
      %35 = vector.broadcast %cst_24 : f32 to vector<16x1xf32>
      %36 = arith.maximumf %34, %35 : vector<16x1xf32>
      %cst_25 = arith.constant 9.99999974E-6 : f32
      %37 = vector.broadcast %cst_25 : f32 to vector<16x1xf32>
      %38 = arith.addf %36, %37 : vector<16x1xf32>
      %39 = math.rsqrt %38 : vector<16x1xf32>
      %c0_26 = arith.constant 0 : index
      %c0_27 = arith.constant 0 : index
      %40 = vector.load %arg7[%c0_26, %c0_27] : memref<1x128xf32, #tpu.memory_space<vmem>>, vector<1x128xf32>
      %c0_28 = arith.constant 0 : index
      %c0_29 = arith.constant 0 : index
      %41 = vector.load %arg8[%c0_28, %c0_29] : memref<1x128xf32, #tpu.memory_space<vmem>>, vector<1x128xf32>
      %42 = vector.broadcast %27 : vector<16x1xf32> to vector<16x128xf32>
      %43 = arith.subf %23, %42 : vector<16x128xf32>
      %44 = vector.broadcast %39 : vector<16x1xf32> to vector<16x128xf32>
      %45 = vector.broadcast %40 : vector<1x128xf32> to vector<16x128xf32>
      %46 = arith.mulf %44, %45 : vector<16x128xf32>
      %47 = arith.mulf %43, %46 : vector<16x128xf32>
      %48 = vector.broadcast %41 : vector<1x128xf32> to vector<16x128xf32>
      %49 = arith.addf %47, %48 : vector<16x128xf32>
      %c0_30 = arith.constant 0 : index
      %c0_31 = arith.constant 0 : index
      %50 = vector.load %arg9[%c0_30, %c0_31] : memref<16x128xf32, #tpu.memory_space<vmem>>, vector<16x128xf32>
      tpu.vector_store %arg9[%c0_30, %c0_31], %49 {strides = array<i32>} : memref<16x128xf32, #tpu.memory_space<vmem>>, vector<16x128xf32>,
    } else {
    }
    return
  }
  func.func @transform_0(%arg0: i32, %arg1: i32) -> (i32, i32) {
    %c0_i32 = arith.constant 0 : i32
    %c0_i32_0 = arith.constant 0 : i32
    return %arg0, %c0_i32 : i32, i32
  }
  func.func @transform_1(%arg0: i32, %arg1: i32) -> (i32, i32) {
    %c0_i32 = arith.constant 0 : i32
    %c0_i32_0 = arith.constant 0 : i32
    return %c0_i32, %arg1 : i32, i32
  }
  func.func @transform_2(%arg0: i32, %arg1: i32) -> (i32, i32) {
    %c0_i32 = arith.constant 0 : i32
    %c0_i32_0 = arith.constant 0 : i32
    return %c0_i32, %arg1 : i32, i32
  }
  func.func @transform_3(%arg0: i32, %arg1: i32) -> (i32, i32) {
    %c0_i32 = arith.constant 0 : i32
    %c0_i32_0 = arith.constant 0 : i32
    return %arg1, %c0_i32 : i32, i32
  }
  func.func @transform_4(%arg0: i32, %arg1: i32) -> (i32, i32) {
    %c0_i32 = arith.constant 0 : i32
    %c0_i32_0 = arith.constant 0 : i32
    %c0_i32_1 = arith.constant 0 : i32
    return %c0_i32, %c0_i32_0 : i32, i32
  }
  func.func @transform_5(%arg0: i32, %arg1: i32) -> (i32, i32) {
    %c0_i32 = arith.constant 0 : i32
    %c0_i32_0 = arith.constant 0 : i32
    %c0_i32_1 = arith.constant 0 : i32
    return %c0_i32, %c0_i32_0 : i32, i32
  }
  func.func @transform_6(%arg0: i32, %arg1: i32) -> (i32, i32) {
    %c0_i32 = arith.constant 0 : i32
    %c0_i32_0 = arith.constant 0 : i32
    %c0_i32_1 = arith.constant 0 : i32
    return %c0_i32, %c0_i32_0 : i32, i32
  }
  func.func @transform_7(%arg0: i32, %arg1: i32) -> (i32, i32) {
    %c0_i32 = arith.constant 0 : i32
    %c0_i32_0 = arith.constant 0 : i32
    return %arg0, %c0_i32 : i32, i32
  }
}

</mosaic_0001>

<llo_original>
// kernel: feed_forward_network.1
$region0: #{feed_forward_network.1}
  #allocation0 [shape = 'u32[]', space=smem, size = 0x4, offset = 0x4, fixed_abs, tag = 'smem constant byte address 0x4 - core index']
  #allocation1 [shape = 'u32[72,128]{1,0:T(1,128)}', space=vmem, size = 0x9000, scoped, tag = 'internal scratch']
  #allocation2 [shape = 'f32[16,128]{1,0:T(8,128)}', space=vmem, size = 0x2000, scoped, tag = 'scratch operand']
  %s0 = inlined_call_operand.hbm [shape: f32[16,128], index: 0, kind: input, shape index: {}]
  %s1 = inlined_call_operand.hbm [shape: f32[128,256], index: 1, kind: input, shape index: {}]
  %s2 = inlined_call_operand.vmem [shape: f32[1,256], index: 2, kind: input, shape index: {}]
  %s3 = inlined_call_operand.hbm [shape: f32[256,128], index: 3, kind: input, shape index: {}]
  %s4 = inlined_call_operand.vmem [shape: f32[1,128], index: 4, kind: input, shape index: {}]
  %s5 = inlined_call_operand.vmem [shape: f32[1,128], index: 5, kind: input, shape index: {}]
  %s6 = inlined_call_operand.vmem [shape: f32[1,128], index: 6, kind: input, shape index: {}]
  %s7 = inlined_call_operand.hbm [shape: f32[16,128], index: 7, kind: output, shape index: {}]
  %s8 = sld [smem:[#allocation0]]
  $region58: #{feed_forward_network.1} parent=0
    _
  %s10 = ssub.s32 1, %s8
  %s11 = scalar_select 0, %s10, %s8
  $region1: #{feed_forward_network.1} parent=0
    #allocation3 [shape = 'u8[8192]{0}', space=vmem, size = 0x2000, scoped, tag = 'input window, operand 0, single buffered']
    #allocation4 [shape = 's32[1]{0}', space=sflag, size = 0x4, scoped, tag = 'scoped memory for feed_forward_network.1']
    #allocation5 [shape = 's32[1]{0}', space=sflag, size = 0x4, scoped, tag = 'scoped memory for feed_forward_network.1']
    #allocation6 [shape = 'u8[131072]{0}', space=vmem, size = 0x20000, scoped, tag = 'input window, operand 1, single buffered']
    #allocation7 [shape = 's32[1]{0}', space=sflag, size = 0x4, scoped, tag = 'scoped memory for feed_forward_network.1']
    #allocation8 [shape = 'u8[131072]{0}', space=vmem, size = 0x20000, scoped, tag = 'input window, operand 3, single buffered']
    #allocation9 [shape = 'u8[8192]{0}', space=vmem, size = 0x2000, scoped, tag = 'output window, operand 0, single buffered']
    %12 = vsyncpa [#allocation4], 0
    %13 = vsyncpa [#allocation7], 0
    %14 = vsyncpa [#allocation5], 0
    // Predicated region
    $region2: #{feed_forward_network.1} parent=1 // pred_check
      _
    $region3: #{feed_forward_network.1} parent=1 // pred_check_branch
      %16 = sbr.rel (0) target = $region5
    $region4: #{feed_forward_network.1} parent=1 // pred_region
      %18 = vsyncadd [#allocation4], 0
      %s19 = sshll.u32 %s0, 4
      %s20 = int_to_ptr.hbm [resolvable:$true] %s19
      %s21 = sshll.u32 [#allocation3], 4
      %s22 = int_to_ptr.vmem [resolvable:$true] %s21
      %27 = dma.hbm_to_vmem [thread:$0]  %s20, 256, %s22, [#allocation4], 128, 128, 8
    $region5: #{feed_forward_network.1} parent=1 // pred_fallthru
      _
    // Predicated region
    $region6: #{feed_forward_network.1} parent=1 // pred_check
      _
    $region7: #{feed_forward_network.1} parent=1 // pred_check_branch
      %29 = sbr.rel (0) target = $region9
    $region8: #{feed_forward_network.1} parent=1 // pred_region
      %31 = vsyncadd [#allocation7], 0
      %s32 = sshll.u32 %s1, 4
      %s33 = int_to_ptr.hbm [resolvable:$true] %s32
      %s34 = sshll.u32 [#allocation6], 4
      %s35 = int_to_ptr.vmem [resolvable:$true] %s34
      %40 = dma.hbm_to_vmem [thread:$0]  %s33, 4096, %s35, [#allocation7], 256, 256, 16
    $region9: #{feed_forward_network.1} parent=1 // pred_fallthru
      _
    // Predicated region
    $region10: #{feed_forward_network.1} parent=1 // pred_check
      _
    $region11: #{feed_forward_network.1} parent=1 // pred_check_branch
      %42 = sbr.rel (0) target = $region13
    $region12: #{feed_forward_network.1} parent=1 // pred_region
      _
    $region13: #{feed_forward_network.1} parent=1 // pred_fallthru
      _
    // Predicated region
    $region14: #{feed_forward_network.1} parent=1 // pred_check
      _
    $region15: #{feed_forward_network.1} parent=1 // pred_check_branch
      %44 = sbr.rel (0) target = $region17
    $region16: #{feed_forward_network.1} parent=1 // pred_region
      %46 = vsyncadd [#allocation7], 0
      %s47 = sshll.u32 %s3, 4
      %s48 = int_to_ptr.hbm [resolvable:$true] %s47
      %s49 = sshll.u32 [#allocation8], 4
      %s50 = int_to_ptr.vmem [resolvable:$true] %s49
      %55 = dma.hbm_to_vmem [thread:$0]  %s48, 4096, %s50, [#allocation7], 128, 128, 8
    $region17: #{feed_forward_network.1} parent=1 // pred_fallthru
      _
    // Predicated region
    $region18: #{feed_forward_network.1} parent=1 // pred_check
      _
    $region19: #{feed_forward_network.1} parent=1 // pred_check_branch
      %57 = sbr.rel (0) target = $region21
    $region20: #{feed_forward_network.1} parent=1 // pred_region
      _
    $region21: #{feed_forward_network.1} parent=1 // pred_fallthru
      _
    // Predicated region
    $region22: #{feed_forward_network.1} parent=1 // pred_check
      _
    $region23: #{feed_forward_network.1} parent=1 // pred_check_branch
      %59 = sbr.rel (0) target = $region25
    $region24: #{feed_forward_network.1} parent=1 // pred_region
      _
    $region25: #{feed_forward_network.1} parent=1 // pred_fallthru
      _
    // Predicated region
    $region26: #{feed_forward_network.1} parent=1 // pred_check
      _
    $region27: #{feed_forward_network.1} parent=1 // pred_check_branch
      %61 = sbr.rel (0) target = $region29
    $region28: #{feed_forward_network.1} parent=1 // pred_region
      _
    $region29: #{feed_forward_network.1} parent=1 // pred_fallthru
      _
    // Predicated region
    $region30: #{feed_forward_network.1} parent=1 // pred_check
      _
    $region31: #{feed_forward_network.1} parent=1 // pred_check_branch
      %63 = sbr.rel (0) target = $region33
    $region32: #{feed_forward_network.1} parent=1 // pred_region
      %65 = dma.done [#allocation4], 256
    $region33: #{feed_forward_network.1} parent=1 // pred_fallthru
      _
    // Predicated region
    $region34: #{feed_forward_network.1} parent=1 // pred_check
      _
    $region35: #{feed_forward_network.1} parent=1 // pred_check_branch
      %67 = sbr.rel (0) target = $region37
    $region36: #{feed_forward_network.1} parent=1 // pred_region
      %69 = dma.done [#allocation7], 4096
    $region37: #{feed_forward_network.1} parent=1 // pred_fallthru
      _
    // Predicated region
    $region38: #{feed_forward_network.1} parent=1 // pred_check
      _
    $region39: #{feed_forward_network.1} parent=1 // pred_check_branch
      %71 = sbr.rel (0) target = $region41
    $region40: #{feed_forward_network.1} parent=1 // pred_region
      %73 = dma.done [#allocation7], 4096
    $region41: #{feed_forward_network.1} parent=1 // pred_fallthru
      _
    %p74 = scmp.eq.s32.totalorder 0, 0
    // Predicated region
    $region42: #{feed_forward_network.1} parent=1 // pred_check
      %p75 = pneg %p74
    $region43: #{feed_forward_network.1} parent=1 // pred_check_branch
      %77 = sbr.rel (%p75) target = $region45
    $region44: #{feed_forward_network.1} parent=1 // pred_region
      %78 = vst [vmem:[#allocation2] sm:$0xff] 0.0
      %79 = vst [vmem:[#allocation2 + $0x8] sm:$0xff] 0.0
    $region45: #{feed_forward_network.1} parent=1 // pred_fallthru
      _
    %v80 = vld [vmem:[#allocation3] sm:$0xff]
    %v81 = vld [vmem:[#allocation3 + $0x8] sm:$0xff]
    %v82 = vld [vmem:[#allocation6] sm:$0xff]
    %v83 = vld [vmem:[#allocation6 + $0x8] sm:$0xff]
    %v84 = vld [vmem:[#allocation6 + $0x10] sm:$0xff]
    %v85 = vld [vmem:[#allocation6 + $0x18] sm:$0xff]
    %v86 = vld [vmem:[#allocation6 + $0x20] sm:$0xff]
    %v87 = vld [vmem:[#allocation6 + $0x28] sm:$0xff]
    %v88 = vld [vmem:[#allocation6 + $0x30] sm:$0xff]
    %v89 = vld [vmem:[#allocation6 + $0x38] sm:$0xff]
    %v90 = vld [vmem:[#allocation6 + $0x40] sm:$0xff]
    %v91 = vld [vmem:[#allocation6 + $0x48] sm:$0xff]
    %v92 = vld [vmem:[#allocation6 + $0x50] sm:$0xff]
    %v93 = vld [vmem:[#allocation6 + $0x58] sm:$0xff]
    %v94 = vld [vmem:[#allocation6 + $0x60] sm:$0xff]
    %v95 = vld [vmem:[#allocation6 + $0x68] sm:$0xff]
    %v96 = vld [vmem:[#allocation6 + $0x70] sm:$0xff]
    %v97 = vld [vmem:[#allocation6 + $0x78] sm:$0xff]
    %v98 = vld [vmem:[#allocation6 + $0x80] sm:$0xff]
    %v99 = vld [vmem:[#allocation6 + $0x88] sm:$0xff]
    %v100 = vld [vmem:[#allocation6 + $0x90] sm:$0xff]
    %v101 = vld [vmem:[#allocation6 + $0x98] sm:$0xff]
    %v102 = vld [vmem:[#allocation6 + $0xa0] sm:$0xff]
    %v103 = vld [vmem:[#allocation6 + $0xa8] sm:$0xff]
    %v104 = vld [vmem:[#allocation6 + $0xb0] sm:$0xff]
    %v105 = vld [vmem:[#allocation6 + $0xb8] sm:$0xff]
    %v106 = vld [vmem:[#allocation6 + $0xc0] sm:$0xff]
    %v107 = vld [vmem:[#allocation6 + $0xc8] sm:$0xff]
    %v108 = vld [vmem:[#allocation6 + $0xd0] sm:$0xff]
    %v109 = vld [vmem:[#allocation6 + $0xd8] sm:$0xff]
    %v110 = vld [vmem:[#allocation6 + $0xe0] sm:$0xff]
    %v111 = vld [vmem:[#allocation6 + $0xe8] sm:$0xff]
    %v112 = vld [vmem:[#allocation6 + $0xf0] sm:$0xff]
    %v113 = vld [vmem:[#allocation6 + $0xf8] sm:$0xff]
    %v114 = vld [vmem:[%s2] sm:$0x3]
    %v116 = vperm.slane %v114, 0
    %v117 = vperm.slane %v114, 1
    %120 = vmatpush.msra.mxu0 %v112
    %121 = vmatpush.msra.mxu0 %v110
    %122 = vmatpush.msra.mxu0 %v108
    %123 = vmatpush.msra.mxu0 %v106
    %124 = vmatpush.msra.mxu0 %v104
    %125 = vmatpush.msra.mxu0 %v102
    %126 = vmatpush.msra.mxu0 %v100
    %127 = vmatpush.msra.mxu0 %v98
    %128 = vmatpush.msra.mxu0 %v96
    %129 = vmatpush.msra.mxu0 %v94
    %130 = vmatpush.msra.mxu0 %v92
    %131 = vmatpush.msra.mxu0 %v90
    %132 = vmatpush.msra.mxu0 %v88
    %133 = vmatpush.msra.mxu0 %v86
    %134 = vmatpush.msra.mxu0 %v84
    %135 = vmatpush.msra.mxu0 %v82
    %136 = vmatmul.f32.gmra.mxu0 %v80
    %v137 = vpop.f32.mrf.mxu0
    %v138 = vadd.f32 %v116, %v137
    %139 = vmatmul.f32.gmra.mxu0 %v81
    %v140 = vpop.f32.mrf.mxu0
    %v141 = vadd.f32 %v116, %v140
    %142 = vdwg.mxu0
    %143 = vmatpush.msra.mxu0 %v113
    %144 = vmatpush.msra.mxu0 %v111
    %145 = vmatpush.msra.mxu0 %v109
    %146 = vmatpush.msra.mxu0 %v107
    %147 = vmatpush.msra.mxu0 %v105
    %148 = vmatpush.msra.mxu0 %v103
    %149 = vmatpush.msra.mxu0 %v101
    %150 = vmatpush.msra.mxu0 %v99
    %151 = vmatpush.msra.mxu0 %v97
    %152 = vmatpush.msra.mxu0 %v95
    %153 = vmatpush.msra.mxu0 %v93
    %154 = vmatpush.msra.mxu0 %v91
    %155 = vmatpush.msra.mxu0 %v89
    %156 = vmatpush.msra.mxu0 %v87
    %157 = vmatpush.msra.mxu0 %v85
    %158 = vmatpush.msra.mxu0 %v83
    %159 = vmatmul.f32.gmra.mxu0 %v80
    %v160 = vpop.f32.mrf.mxu0
    %v161 = vadd.f32 %v117, %v160
    %162 = vmatmul.f32.gmra.mxu0 %v81
    %v163 = vpop.f32.mrf.mxu0
    %v164 = vadd.f32 %v117, %v163
    %165 = vdwg.mxu0
    %v166 = vmax.f32 %v138, 0.0
    %v167 = vmax.f32 %v161, 0.0
    %v168 = vmax.f32 %v141, 0.0
    %v169 = vmax.f32 %v164, 0.0
    %v170 = vld [vmem:[#allocation2] sm:$0xff]
    %v171 = vld [vmem:[#allocation2 + $0x8] sm:$0xff]
    %v172 = vld [vmem:[#allocation8] sm:$0xff]
    %v173 = vld [vmem:[#allocation8 + $0x8] sm:$0xff]
    %v174 = vld [vmem:[#allocation8 + $0x10] sm:$0xff]
    %v175 = vld [vmem:[#allocation8 + $0x18] sm:$0xff]
    %v176 = vld [vmem:[#allocation8 + $0x20] sm:$0xff]
    %v177 = vld [vmem:[#allocation8 + $0x28] sm:$0xff]
    %v178 = vld [vmem:[#allocation8 + $0x30] sm:$0xff]
    %v179 = vld [vmem:[#allocation8 + $0x38] sm:$0xff]
    %v180 = vld [vmem:[#allocation8 + $0x40] sm:$0xff]
    %v181 = vld [vmem:[#allocation8 + $0x48] sm:$0xff]
    %v182 = vld [vmem:[#allocation8 + $0x50] sm:$0xff]
    %v183 = vld [vmem:[#allocation8 + $0x58] sm:$0xff]
    %v184 = vld [vmem:[#allocation8 + $0x60] sm:$0xff]
    %v185 = vld [vmem:[#allocation8 + $0x68] sm:$0xff]
    %v186 = vld [vmem:[#allocation8 + $0x70] sm:$0xff]
    %v187 = vld [vmem:[#allocation8 + $0x78] sm:$0xff]
    %v188 = vld [vmem:[#allocation8 + $0x80] sm:$0xff]
    %v189 = vld [vmem:[#allocation8 + $0x88] sm:$0xff]
    %v190 = vld [vmem:[#allocation8 + $0x90] sm:$0xff]
    %v191 = vld [vmem:[#allocation8 + $0x98] sm:$0xff]
    %v192 = vld [vmem:[#allocation8 + $0xa0] sm:$0xff]
    %v193 = vld [vmem:[#allocation8 + $0xa8] sm:$0xff]
    %v194 = vld [vmem:[#allocation8 + $0xb0] sm:$0xff]
    %v195 = vld [vmem:[#allocation8 + $0xb8] sm:$0xff]
    %v196 = vld [vmem:[#allocation8 + $0xc0] sm:$0xff]
    %v197 = vld [vmem:[#allocation8 + $0xc8] sm:$0xff]
    %v198 = vld [vmem:[#allocation8 + $0xd0] sm:$0xff]
    %v199 = vld [vmem:[#allocation8 + $0xd8] sm:$0xff]
    %v200 = vld [vmem:[#allocation8 + $0xe0] sm:$0xff]
    %v201 = vld [vmem:[#allocation8 + $0xe8] sm:$0xff]
    %v202 = vld [vmem:[#allocation8 + $0xf0] sm:$0xff]
    %v203 = vld [vmem:[#allocation8 + $0xf8] sm:$0xff]
    %204 = vmatpush.msra.mxu0 %v187
    %205 = vmatpush.msra.mxu0 %v186
    %206 = vmatpush.msra.mxu0 %v185
    %207 = vmatpush.msra.mxu0 %v184
    %208 = vmatpush.msra.mxu0 %v183
    %209 = vmatpush.msra.mxu0 %v182
    %210 = vmatpush.msra.mxu0 %v181
    %211 = vmatpush.msra.mxu0 %v180
    %212 = vmatpush.msra.mxu0 %v179
    %213 = vmatpush.msra.mxu0 %v178
    %214 = vmatpush.msra.mxu0 %v177
    %215 = vmatpush.msra.mxu0 %v176
    %216 = vmatpush.msra.mxu0 %v175
    %217 = vmatpush.msra.mxu0 %v174
    %218 = vmatpush.msra.mxu0 %v173
    %219 = vmatpush.msra.mxu0 %v172
    %220 = vmatmul.f32.gmra.mxu0 %v166
    %v221 = vpop.f32.mrf.mxu0
    %v222 = vadd.f32 0.0, %v221
    %223 = vmatmul.f32.gmra.mxu0 %v168
    %v224 = vpop.f32.mrf.mxu0
    %v225 = vadd.f32 0.0, %v224
    %226 = vdwg.mxu0
    %227 = vmatpush.msra.mxu0 %v203
    %228 = vmatpush.msra.mxu0 %v202
    %229 = vmatpush.msra.mxu0 %v201
    %230 = vmatpush.msra.mxu0 %v200
    %231 = vmatpush.msra.mxu0 %v199
    %232 = vmatpush.msra.mxu0 %v198
    %233 = vmatpush.msra.mxu0 %v197
    %234 = vmatpush.msra.mxu0 %v196
    %235 = vmatpush.msra.mxu0 %v195
    %236 = vmatpush.msra.mxu0 %v194
    %237 = vmatpush.msra.mxu0 %v193
    %238 = vmatpush.msra.mxu0 %v192
    %239 = vmatpush.msra.mxu0 %v191
    %240 = vmatpush.msra.mxu0 %v190
    %241 = vmatpush.msra.mxu0 %v189
    %242 = vmatpush.msra.mxu0 %v188
    %243 = vmatmul.f32.gmra.mxu0 %v167
    %v244 = vpop.f32.mrf.mxu0
    %v245 = vadd.f32 %v222, %v244
    %246 = vmatmul.f32.gmra.mxu0 %v169
    %v247 = vpop.f32.mrf.mxu0
    %v248 = vadd.f32 %v225, %v247
    %249 = vdwg.mxu0
    %v250 = vadd.f32 %v170, %v245
    %v251 = vadd.f32 %v171, %v248
    %252 = vst [vmem:[#allocation2] sm:$0xff] %v250
    %253 = vst [vmem:[#allocation2 + $0x8] sm:$0xff] %v251
    // Predicated region
    $region46: #{feed_forward_network.1} parent=1 // pred_check
      %p254 = pneg %p74
    $region47: #{feed_forward_network.1} parent=1 // pred_check_branch
      %256 = sbr.rel (%p254) target = $region49
    $region48: #{feed_forward_network.1} parent=1 // pred_region
      %v257 = vld [vmem:[#allocation2] sm:$0xff]
      %v258 = vld [vmem:[#allocation2 + $0x8] sm:$0xff]
      %v259 = vld [vmem:[%s4] sm:$0x1]
      %v261 = vperm.slane %v259, 0
      %v263 = vadd.f32 %v257, %v261
      %v264 = vadd.f32 %v258, %v261
      %v265 = vadd.f32 %v263, %v80
      %v266 = vadd.f32 %v264, %v81
      %267 = vadd.xlane.f32.xlu0 %v265
      %v268 = vpop.xlane.xlu0 %267
      %269 = vadd.xlane.f32.xlu0 %v266
      %v270 = vpop.xlane.xlu0 %269
      %v271 = vmul.f32 %v268, 0.0078125
      %v272 = vmul.f32 %v270, 0.0078125
      %v273 = vmul.f32 %v265, %v265
      %v274 = vmul.f32 %v266, %v266
      %275 = vadd.xlane.f32.xlu0 %v273
      %v276 = vpop.xlane.xlu0 %275
      %277 = vadd.xlane.f32.xlu0 %v274
      %v278 = vpop.xlane.xlu0 %277
      %v279 = vmul.f32 %v276, 0.0078125
      %v280 = vmul.f32 %v278, 0.0078125
      %v281 = vmul.f32 %v271, %v271
      %v282 = vmul.f32 %v272, %v272
      %v283 = vsub.f32 %v279, %v281
      %v284 = vsub.f32 %v280, %v282
      %v285 = vmax.f32 %v283, 0.0
      %v286 = vmax.f32 %v284, 0.0
      %v287 = vadd.f32 %v285, 1e-05
      %v288 = vadd.f32 %v286, 1e-05
      %v289 = vrsqrt.pop %v287
      %v290 = vmul.f32 %v289, %v287
      %v291 = vmul.f32 %v290, %v289
      %v292 = vmul.f32 0.5, %v291
      %v293 = vsub.f32 1.5, %v292
      %v294 = vmul.f32 %v289, %v293
      %vm295 = vweird.f32 %v287
      %vm296 = vweird.f32 %v289
      %vm297 = vmor %vm295, %vm296
      %v298 = vsel %vm297, %v289, %v294
      %v299 = vrsqrt.pop %v288
      %v300 = vmul.f32 %v299, %v288
      %v301 = vmul.f32 %v300, %v299
      %v302 = vmul.f32 0.5, %v301
      %v303 = vsub.f32 1.5, %v302
      %v304 = vmul.f32 %v299, %v303
      %vm305 = vweird.f32 %v288
      %vm306 = vweird.f32 %v299
      %vm307 = vmor %vm305, %vm306
      %v308 = vsel %vm307, %v299, %v304
      %v309 = vld [vmem:[%s5] sm:$0x1]
      %v310 = vld [vmem:[%s6] sm:$0x1]
      %v311 = vsub.f32 %v265, %v271
      %v312 = vsub.f32 %v266, %v272
      %v314 = vperm.slane %v309, 0
      %v316 = vmul.f32 %v298, %v314
      %v317 = vmul.f32 %v308, %v314
      %v318 = vmul.f32 %v311, %v316
      %v319 = vmul.f32 %v312, %v317
      %v321 = vperm.slane %v310, 0
      %v323 = vadd.f32 %v318, %v321
      %v324 = vadd.f32 %v319, %v321
      %325 = vst [vmem:[#allocation9] sm:$0xff] %v323
      %326 = vst [vmem:[#allocation9 + $0x8] sm:$0xff] %v324
    $region49: #{feed_forward_network.1} parent=1 // pred_fallthru
      _
    // Predicated region
    $region50: #{feed_forward_network.1} parent=1 // pred_check
      _
    $region51: #{feed_forward_network.1} parent=1 // pred_check_branch
      %328 = sbr.rel (0) target = $region53
    $region52: #{feed_forward_network.1} parent=1 // pred_region
      %330 = vsyncadd [#allocation5], 0
      %s331 = sshll.u32 [#allocation9], 4
      %s332 = int_to_ptr.vmem [resolvable:$true] %s331
      %s333 = sshll.u32 %s7, 4
      %s334 = int_to_ptr.hbm [resolvable:$true] %s333
      %339 = dma.vmem_to_hbm [thread:$0]  %s332, 256, %s334, [#allocation5], 128, 128, 8
    $region53: #{feed_forward_network.1} parent=1 // pred_fallthru
      _
    // Predicated region
    $region54: #{feed_forward_network.1} parent=1 // pred_check
      _
    $region55: #{feed_forward_network.1} parent=1 // pred_check_branch
      %341 = sbr.rel (0) target = $region57
    $region56: #{feed_forward_network.1} parent=1 // pred_region
      %343 = dma.done [#allocation5], 256
    $region57: #{feed_forward_network.1} parent=1 // pred_fallthru
      _
    %344 = vsyncpa [#allocation4], 1
    %345 = vsyncpa [#allocation7], 1
    %346 = vsyncpa [#allocation5], 1

</llo_original>
